<compile_context>
chip_gen: v6e
topology: v6e:2x2x1
jax: 0.10.0
libtpu: 0.0.40
codegen_flags: <defaults>
</compile_context>

<pallas_src>
import functools
import math

import jax
import jax.numpy as jnp
from jax.experimental import pallas as pl
from jax.experimental.pallas import tpu as pltpu


def _round_up(x, m):
    return ((x + m - 1) // m) * m


def _padded_vmem_bytes(shape, dtype):
    """Bytes a VMEM tile of `shape` really occupies (last dim padded to 128 lanes,
    second-to-last padded to the dtype's sublane packing)."""
    dt = jnp.dtype(dtype)
    sub = max(8, 32 // dt.itemsize)
    if len(shape) == 1:
        r, c = 1, shape[0]
    else:
        r, c = shape[-2], shape[-1]
    lead = math.prod([int(d) for d in shape[:-2]]) if len(shape) > 2 else 1
    return lead * _round_up(max(int(r), 1), sub) * _round_up(int(c), 128) * dt.itemsize


# ----------------------------- Pallas kernel -----------------------------

def _fused_kernel(feat_ref, art_ref, scale_ref,
                  w_cat_ref, b_cat_ref,
                  rff_w2_ref, rff_b2_ref,
                  w_out_ref, b_out_ref,
                  out_ref, art_out_ref,
                  *, hidden, norm_threshold, ln_eps, matmul_dtype):
    # One tile of rows: feat_ref is (TM, D_in); art_ref is (TM // pack_a, A * pack_a).
    x = feat_ref[...].astype(jnp.float32)

    # norms = (features ** 2).sum(-1) ** 0.5   (per-row, f32)
    norms = jnp.sqrt(jnp.sum(x * x, axis=-1, keepdims=True))            # (TM, 1)

    # First two Linears folded into ONE wide dot (exact: no nonlinearity between):
    #   hc[:, :H] = x @ w_in            + b_in                 (MLP input Linear)
    #   hc[:, H:] = x @ (w_in @ rff_w1) + (b_in@rff_w1 + rff_b1)  (pre-ReLU RFF linear1)
    xm = x.astype(matmul_dtype)
    hc = jnp.dot(xm, w_cat_ref[...], preferred_element_type=jnp.float32) + b_cat_ref[...]
    h = hc[:, :hidden]
    h1 = jnp.maximum(hc[:, hidden:], 0.0)

    # RFF linear2 + residual (dropout == identity in eval).
    h2 = jnp.dot(h1.astype(matmul_dtype), rff_w2_ref[...],
                 preferred_element_type=jnp.float32) + rff_b2_ref[...]
    h = h + h2

    # LayerNorm statistics in f32 (affine folded into w_out'/b_out' in the wrapper).
    mean = jnp.mean(h, axis=-1, keepdims=True)
    c = h - mean
    var = jnp.mean(c * c, axis=-1, keepdims=True)
    hn = c * jax.lax.rsqrt(var + ln_eps)

    # Final Linear (LayerNorm gamma/beta already folded in).
    y = jnp.dot(hn.astype(matmul_dtype), w_out_ref[...],
                preferred_element_type=jnp.float32) + b_out_ref[...]

    # input[norms < normthreshold] = 0.0
    y = jnp.where(norms < norm_threshold, 0.0, y)
    out_ref[...] = y.astype(out_ref.dtype)

    # art[..., pitch_idx] *= pitch_amp  (lane-dense packed: pack_a rows / 128 lanes,
    # precomputed per-lane scale vector -> plain full-width vector multiply+store).
    art_out_ref[...] = art_ref[...] * scale_ref[...]


# ----------------------------- wrapper -----------------------------

def segment_synthesis_forward(features, art, params, *,
                              pitch_amp=5.0, pitch_idx=12,
                              norm_threshold=1e-4, ln_eps=1e-5,
                              row_tile=1024, io_dtype=None,
                              matmul_dtype=jnp.bfloat16):
    """Features-branch of SegmentSynthesis.forward (no Hubert / segmentation / CFM).

    features: [B, T, D_in], art: [B, T, A]  ->  {"input": [B, T, D_out], "art": [B, T, A]}
    """
    B, T, D_in = features.shape
    A = art.shape[-1]
    H = params["w_in"].shape[1]
    D_out = params["w_out"].shape[1]
    rows = B * T

    in_dtype = jnp.dtype(io_dtype) if io_dtype is not None else jnp.dtype(features.dtype)
    out_dtype = in_dtype
    art_dtype = jnp.dtype(art.dtype)
    mm_dtype = jnp.dtype(matmul_dtype)
    f32 = jnp.float32
    hi = jax.lax.Precision.HIGHEST

    # ---------------- wrapper-side weight folding (exact up to f32 rounding) ----------------
    w_in = params["w_in"].astype(f32)
    b_in = params["b_in"].astype(f32).reshape(1, H)
    rff_w1 = params["rff_w1"].astype(f32)
    rff_b1 = params["rff_b1"].astype(f32).reshape(1, H)
    rff_w2 = params["rff_w2"].astype(f32)
    rff_b2 = params["rff_b2"].astype(f32).reshape(1, H)
    ln_g = params["ln_g"].astype(f32).reshape(1, H)
    ln_b = params["ln_b"].astype(f32).reshape(1, H)
    w_out = params["w_out"].astype(f32)
    b_out = params["b_out"].astype(f32).reshape(1, D_out)

    # (1) Fold Linear(in->H) and RFF.linear1 into one N=2H dot.
    w_cat = jnp.concatenate([w_in, jnp.dot(w_in, rff_w1, precision=hi)], axis=1)      # (D_in, 2H)
    b_cat = jnp.concatenate([b_in, jnp.dot(b_in, rff_w1, precision=hi) + rff_b1],
                            axis=1)                                                   # (1, 2H)
    # (2) Fold LayerNorm affine into the output Linear.
    w_out_f = ln_g.reshape(H, 1) * w_out                                              # (H, D_out)
    b_out_f = jnp.dot(ln_b, w_out, precision=hi) + b_out                              # (1, D_out)

    # (3) bf16 matmul operands (f32 accumulation inside the kernel).
    w_cat_m = w_cat.astype(mm_dtype)
    rff_w2_m = rff_w2.astype(mm_dtype)
    w_out_m = w_out_f.astype(mm_dtype)

    # ---------------- row tiling / lane-dense art packing ----------------
    feat_sub = max(8, 32 // in_dtype.itemsize)              # sublane pack of the feature stream
    art_sub = max(8, 32 // art_dtype.itemsize)
    pack_a = (128 // A) if (0 < A <= 128 and 128 % A == 0) else 1   # rows per 128-lane art row
    g = math.lcm(feat_sub, art_sub * pack_a)                # row granularity of a tile

    rows_g = _round_up(rows, g)
    tile = min(_round_up(max(int(row_tile), g), g), rows_g)
    # Ensure >= 2 grid steps when the row count allows it, so dimension_semantics=
    # ("parallel",) can shard the row axis across both v7x TensorCores.
    if tile >= rows_g and rows_g >= 2 * g:
        tile = _round_up(rows_g // 2, g)

    # ---------------- VMEM budget (lane-padded widths, generation-aware ceiling) ----------------
    try:
        vmem_cap = int(pltpu.get_tpu_info().vmem_capacity_bytes)
    except Exception:
        vmem_cap = 64 << 20                                  # conservative: v7x per-core VMEM
    vmem_ceiling = max(24 << 20, (vmem_cap * 3) // 4)

    scale_shape = (1, A * pack_a)
    const_arrays_meta = [
        (scale_shape, art_dtype),
        (w_cat_m.shape, mm_dtype), (b_cat.shape, f32),
        (rff_w2_m.shape, mm_dtype), (rff_b2.shape, f32),
        (w_out_m.shape, mm_dtype), (b_out_f.shape, f32),
    ]
    const_bytes = 2 * sum(_padded_vmem_bytes(s, d) for s, d in const_arrays_meta)

    def _stream_bytes(t):                                    # double-buffered streamed tiles
        return 2 * (_padded_vmem_bytes((t, D_in), in_dtype)
                    + _padded_vmem_bytes((t, D_out), out_dtype)
                    + 2 * _padded_vmem_bytes((t // pack_a, A * pack_a), art_dtype))

    while tile > g and const_bytes + _stream_bytes(tile) + (8 << 20) > vmem_ceiling:
        tile = max(g, ((tile // 2) // g) * g)

    rows_p = _round_up(rows, tile)
    grid = rows_p // tile
    vmem_limit = int(min(max(const_bytes + _stream_bytes(tile) + (8 << 20), 24 << 20),
                         vmem_ceiling))

    # ---------------- input packing ----------------
    feat2d = features.reshape(rows, D_in).astype(in_dtype)
    art2d = art.reshape(rows, A)
    if rows_p != rows:
        # Zero-padded rows have norm 0 < threshold -> masked to 0; sliced off below.
        feat2d = jnp.pad(feat2d, ((0, rows_p - rows), (0, 0)))
        art2d = jnp.pad(art2d, ((0, rows_p - rows), (0, 0)))
    art_packed = art2d.reshape(rows_p // pack_a, A * pack_a)

    scale_base = jnp.ones((A,), art_dtype).at[pitch_idx].set(
        jnp.asarray(pitch_amp, art_dtype))
    scale_vec = jnp.tile(scale_base, pack_a).reshape(1, A * pack_a)

    full = lambda arr: pl.BlockSpec(arr.shape, lambda i: (0, 0))
    kernel = functools.partial(_fused_kernel, hidden=H,
                               norm_threshold=norm_threshold, ln_eps=ln_eps,
                               matmul_dtype=mm_dtype)

    out2d, art_out_packed = pl.pallas_call(
        kernel,
        out_shape=(jax.ShapeDtypeStruct((rows_p, D_out), out_dtype),
                   jax.ShapeDtypeStruct((rows_p // pack_a, A * pack_a), art_dtype)),
        grid=(grid,),
        in_specs=[
            pl.BlockSpec((tile, D_in), lambda i: (i, 0)),                   # feature tile
            pl.BlockSpec((tile // pack_a, A * pack_a), lambda i: (i, 0)),   # art tile (lane-dense)
            full(scale_vec),                                                # pitch lane-scale
            full(w_cat_m), full(b_cat),                                     # folded Linear+RFF.linear1
            full(rff_w2_m), full(rff_b2),                                   # RFF.linear2
            full(w_out_m), full(b_out_f),                                   # output Linear (+LN affine)
        ],
        out_specs=(pl.BlockSpec((tile, D_out), lambda i: (i, 0)),
                   pl.BlockSpec((tile // pack_a, A * pack_a), lambda i: (i, 0))),
        compiler_params=pltpu.CompilerParams(
            dimension_semantics=("parallel",),
            vmem_limit_bytes=vmem_limit),
    )(feat2d, art_packed, scale_vec,
      w_cat_m, b_cat, rff_w2_m, rff_b2, w_out_m, b_out_f)

    inp = out2d[:rows].reshape(B, T, D_out)
    art_scaled = art_out_packed.reshape(rows_p, A)[:rows].reshape(B, T, A)
    # TODO(synk): cfm_loss requires ConditionalFlowMatcherWrapperRegressor; not reproduced.
    return {"input": inp, "art": art_scaled}


# ----------------------------- reference (pure JAX) -----------------------------

def _reference(features, art, params, pitch_amp=5.0):
    x = features.astype(jnp.float32)
    norms = jnp.sqrt(jnp.sum(x * x, axis=-1, keepdims=True))
    h = x @ params["w_in"] + params["b_in"]
    h2 = jnp.maximum(h @ params["rff_w1"] + params["rff_b1"], 0.0) @ params["rff_w2"] + params["rff_b2"]
    h = h + h2
    mean = jnp.mean(h, -1, keepdims=True)
    var = jnp.mean((h - mean) ** 2, -1, keepdims=True)
    h = (h - mean) * jax.lax.rsqrt(var + 1e-5) * params["ln_g"] + params["ln_b"]
    y = h @ params["w_out"] + params["b_out"]
    y = jnp.where(norms < 1e-4, 0.0, y)
    a = art.at[..., 12].multiply(pitch_amp)
    return y, a


# ----------------------------- main -----------------------------

if __name__ == "__main__":
    key = jax.random.PRNGKey(0)

    # Small shapes: batch=2, seq=16, enc_dim=32, MLP hidden_dims=[32], output_dim=32,
    # articulation dim=16 (index 12 is pitch).
    B, T, D_IN, H, D_OUT, A = 2, 16, 32, 32, 32, 16

    ks = jax.random.split(key, 16)
    scale = 0.1
    params = {
        "w_in":  scale * jax.random.normal(ks[0], (D_IN, H), jnp.float32),
        "b_in":  scale * jax.random.normal(ks[1], (1, H), jnp.float32),
        "rff_w1": scale * jax.random.normal(ks[2], (H, H), jnp.float32),
        "rff_b1": scale * jax.random.normal(ks[3], (1, H), jnp.float32),
        "rff_w2": scale * jax.random.normal(ks[4], (H, H), jnp.float32),
        "rff_b2": scale * jax.random.normal(ks[5], (1, H), jnp.float32),
        "ln_g":  jnp.ones((1, H), jnp.float32),
        "ln_b":  jnp.zeros((1, H), jnp.float32),
        "w_out": scale * jax.random.normal(ks[6], (H, D_OUT), jnp.float32),
        "b_out": scale * jax.random.normal(ks[7], (1, D_OUT), jnp.float32),
    }

    features = jax.random.normal(ks[8], (B, T, D_IN), jnp.float32)
    # Zero a couple of frames so the norm-threshold masking path is exercised.
    features = features.at[0, 3].set(0.0).at[1, 7].set(0.0)
    art = jax.random.normal(ks[9], (B, T, A), jnp.float32)

    ref_inp, ref_art = _reference(features, art, params, pitch_amp=5.0)

    # --- default path: bf16 MXU operands (f32 accumulation), f32 I/O ---
    out = segment_synthesis_forward(features, art, params, pitch_amp=5.0)
    out = jax.tree_util.tree_map(jax.block_until_ready, out)
    assert out["input"].shape == (B, T, D_OUT) and out["art"].shape == (B, T, A)
    assert jnp.allclose(out["input"], ref_inp, atol=3e-2, rtol=3e-2)
    assert jnp.allclose(out["art"], ref_art, atol=1e-6, rtol=1e-6)

    # --- f32 MXU path: proves the w_in·rff_w1 and LayerNorm-affine folds are exact ---
    out_f32 = segment_synthesis_forward(features, art, params, pitch_amp=5.0,
                                        matmul_dtype=jnp.float32)
    out_f32 = jax.tree_util.tree_map(jax.block_until_ready, out_f32)
    assert jnp.allclose(out_f32["input"], ref_inp, atol=5e-5, rtol=5e-5)
    assert jnp.allclose(out_f32["art"], ref_art, atol=1e-6, rtol=1e-6)

    # --- bf16 I/O path (halves streamed bytes; norms computed from bf16 features, so
    #     only rows within ~0.4% of the 1e-4 threshold could mask differently) ---
    out_bf16 = segment_synthesis_forward(features, art, params, pitch_amp=5.0,
                                         io_dtype=jnp.bfloat16)
    out_bf16 = jax.tree_util.tree_map(jax.block_until_ready, out_bf16)
    assert jnp.allclose(out_bf16["input"].astype(jnp.float32), ref_inp,
                        atol=6e-2, rtol=6e-2)
    assert jnp.allclose(out_bf16["art"], ref_art, atol=1e-6, rtol=1e-6)

    print("KERNEL_OK")
</pallas_src>

<mosaic_0001>
module attributes {stable_mosaic.version = 11 : i64} {
  func.func @_fused_kernel(%arg0: i32, %arg1: memref<64x32xf32, #tpu.memory_space<vmem>>, %arg2: memref<8x128xf32, #tpu.memory_space<vmem>>, %arg3: memref<1x128xf32, #tpu.memory_space<vmem>>, %arg4: memref<32x64xbf16, #tpu.memory_space<vmem>>, %arg5: memref<1x64xf32, #tpu.memory_space<vmem>>, %arg6: memref<32x32xbf16, #tpu.memory_space<vmem>>, %arg7: memref<1x32xf32, #tpu.memory_space<vmem>>, %arg8: memref<32x32xbf16, #tpu.memory_space<vmem>>, %arg9: memref<1x32xf32, #tpu.memory_space<vmem>>, %arg10: memref<64x32xf32, #tpu.memory_space<vmem>>, %arg11: memref<8x128xf32, #tpu.memory_space<vmem>>) attributes {dimension_semantics = [#tpu.dimension_semantics<parallel>], iteration_bounds = array<i64: 1>, scalar_prefetch = 0 : i64, scratch_operands = 0 : i64, tpu.core_type = #tpu.core_type<tc>, window_params = [{transform_indices = @transform_0, window_bounds = array<i64: 64, 32>}, {transform_indices = @transform_1, window_bounds = array<i64: 8, 128>}, {pipeline_mode = #tpu.pipeline_mode<synchronous>, transform_indices = @transform_2, window_bounds = array<i64: 1, 128>}, {pipeline_mode = #tpu.pipeline_mode<synchronous>, transform_indices = @transform_3, window_bounds = array<i64: 32, 64>}, {pipeline_mode = #tpu.pipeline_mode<synchronous>, transform_indices = @transform_4, window_bounds = array<i64: 1, 64>}, {pipeline_mode = #tpu.pipeline_mode<synchronous>, transform_indices = @transform_5, window_bounds = array<i64: 32, 32>}, {pipeline_mode = #tpu.pipeline_mode<synchronous>, transform_indices = @transform_6, window_bounds = array<i64: 1, 32>}, {pipeline_mode = #tpu.pipeline_mode<synchronous>, transform_indices = @transform_7, window_bounds = array<i64: 32, 32>}, {pipeline_mode = #tpu.pipeline_mode<synchronous>, transform_indices = @transform_8, window_bounds = array<i64: 1, 32>}, {transform_indices = @transform_9, window_bounds = array<i64: 64, 32>}, {transform_indices = @transform_10, window_bounds = array<i64: 8, 128>}]} {
    %c0 = arith.constant 0 : index
    %c0_0 = arith.constant 0 : index
    %0 = vector.load %arg1[%c0, %c0_0] : memref<64x32xf32, #tpu.memory_space<vmem>>, vector<64x32xf32>
    %1 = arith.mulf %0, %0 : vector<64x32xf32>
    %cst = arith.constant dense<0.000000e+00> : vector<64xf32>
    %2 = vector.multi_reduction <add>, %1, %cst [1] : vector<64x32xf32> to vector<64xf32>
    %3 = vector.shape_cast %2 : vector<64xf32> to vector<64x1xf32>
    %4 = math.sqrt %3 : vector<64x1xf32>
    %5 = arith.truncf %0 : vector<64x32xf32> to vector<64x32xbf16>
    %c0_1 = arith.constant 0 : index
    %c0_2 = arith.constant 0 : index
    %6 = vector.load %arg4[%c0_1, %c0_2] : memref<32x64xbf16, #tpu.memory_space<vmem>>, vector<32x64xbf16>
    %cst_3 = arith.constant dense<0.000000e+00> : vector<64x64xf32>
    %7 = tpu.matmul %5, %6, %cst_3 {dimension_numbers = #tpu.dot_dimension_numbers<[1], [0], [0], [1], [0, 0, 1, 1], [], []>} : vector<64x32xbf16>, vector<32x64xbf16>, vector<64x64xf32> -> vector<64x64xf32>
    %c0_4 = arith.constant 0 : index
    %c0_5 = arith.constant 0 : index
    %8 = vector.load %arg5[%c0_4, %c0_5] : memref<1x64xf32, #tpu.memory_space<vmem>>, vector<1x64xf32>
    %9 = vector.broadcast %8 : vector<1x64xf32> to vector<64x64xf32>
    %10 = arith.addf %7, %9 : vector<64x64xf32>
    %11 = vector.extract_strided_slice %10 {offsets = [0, 0], sizes = [64, 32], strides = [1, 1]} : vector<64x64xf32> to vector<64x32xf32>
    %12 = vector.extract_strided_slice %10 {offsets = [0, 32], sizes = [64, 32], strides = [1, 1]} : vector<64x64xf32> to vector<64x32xf32>
    %cst_6 = arith.constant 0.000000e+00 : f32
    %13 = vector.broadcast %cst_6 : f32 to vector<64x32xf32>
    %14 = arith.maximumf %12, %13 : vector<64x32xf32>
    %15 = arith.truncf %14 : vector<64x32xf32> to vector<64x32xbf16>
    %c0_7 = arith.constant 0 : index
    %c0_8 = arith.constant 0 : index
    %16 = vector.load %arg6[%c0_7, %c0_8] : memref<32x32xbf16, #tpu.memory_space<vmem>>, vector<32x32xbf16>
    %cst_9 = arith.constant dense<0.000000e+00> : vector<64x32xf32>
    %17 = tpu.matmul %15, %16, %cst_9 {dimension_numbers = #tpu.dot_dimension_numbers<[1], [0], [0], [1], [0, 0, 1, 1], [], []>} : vector<64x32xbf16>, vector<32x32xbf16>, vector<64x32xf32> -> vector<64x32xf32>
    %c0_10 = arith.constant 0 : index
    %c0_11 = arith.constant 0 : index
    %18 = vector.load %arg7[%c0_10, %c0_11] : memref<1x32xf32, #tpu.memory_space<vmem>>, vector<1x32xf32>
    %19 = vector.broadcast %18 : vector<1x32xf32> to vector<64x32xf32>
    %20 = arith.addf %17, %19 : vector<64x32xf32>
    %21 = arith.addf %11, %20 : vector<64x32xf32>
    %cst_12 = arith.constant dense<0.000000e+00> : vector<64xf32>
    %22 = vector.multi_reduction <add>, %21, %cst_12 [1] : vector<64x32xf32> to vector<64xf32>
    %23 = vector.shape_cast %22 : vector<64xf32> to vector<64x1xf32>
    %cst_13 = arith.constant 3.200000e+01 : f32
    %24 = vector.broadcast %cst_13 : f32 to vector<64x1xf32>
    %25 = arith.divf %23, %24 : vector<64x1xf32>
    %26 = vector.broadcast %25 : vector<64x1xf32> to vector<64x32xf32>
    %27 = arith.subf %21, %26 : vector<64x32xf32>
    %28 = arith.mulf %27, %27 : vector<64x32xf32>
    %cst_14 = arith.constant dense<0.000000e+00> : vector<64xf32>
    %29 = vector.multi_reduction <add>, %28, %cst_14 [1] : vector<64x32xf32> to vector<64xf32>
    %30 = vector.shape_cast %29 : vector<64xf32> to vector<64x1xf32>
    %cst_15 = arith.constant 3.200000e+01 : f32
    %31 = vector.broadcast %cst_15 : f32 to vector<64x1xf32>
    %32 = arith.divf %30, %31 : vector<64x1xf32>
    %cst_16 = arith.constant 9.99999974E-6 : f32
    %33 = vector.broadcast %cst_16 : f32 to vector<64x1xf32>
    %34 = arith.addf %32, %33 : vector<64x1xf32>
    %35 = math.rsqrt %34 : vector<64x1xf32>
    %36 = vector.broadcast %35 : vector<64x1xf32> to vector<64x32xf32>
    %37 = arith.mulf %27, %36 : vector<64x32xf32>
    %38 = arith.truncf %37 : vector<64x32xf32> to vector<64x32xbf16>
    %c0_17 = arith.constant 0 : index
    %c0_18 = arith.constant 0 : index
    %39 = vector.load %arg8[%c0_17, %c0_18] : memref<32x32xbf16, #tpu.memory_space<vmem>>, vector<32x32xbf16>
    %cst_19 = arith.constant dense<0.000000e+00> : vector<64x32xf32>
    %40 = tpu.matmul %38, %39, %cst_19 {dimension_numbers = #tpu.dot_dimension_numbers<[1], [0], [0], [1], [0, 0, 1, 1], [], []>} : vector<64x32xbf16>, vector<32x32xbf16>, vector<64x32xf32> -> vector<64x32xf32>
    %c0_20 = arith.constant 0 : index
    %c0_21 = arith.constant 0 : index
    %41 = vector.load %arg9[%c0_20, %c0_21] : memref<1x32xf32, #tpu.memory_space<vmem>>, vector<1x32xf32>
    %42 = vector.broadcast %41 : vector<1x32xf32> to vector<64x32xf32>
    %43 = arith.addf %40, %42 : vector<64x32xf32>
    %cst_22 = arith.constant 9.99999974E-5 : f32
    %44 = vector.broadcast %cst_22 : f32 to vector<64x1xf32>
    %45 = arith.cmpf olt, %4, %44 : vector<64x1xf32>
    %cst_23 = arith.constant 0.000000e+00 : f32
    %46 = vector.shape_cast %45 : vector<64x1xi1> to vector<64x1xi1>
    %47 = vector.broadcast %46 : vector<64x1xi1> to vector<64x32xi1>
    %48 = vector.broadcast %cst_23 : f32 to vector<64x32xf32>
    %49 = arith.select %47, %48, %43 : vector<64x32xi1>, vector<64x32xf32>
    %c0_24 = arith.constant 0 : index
    %c0_25 = arith.constant 0 : index
    %50 = vector.load %arg10[%c0_24, %c0_25] : memref<64x32xf32, #tpu.memory_space<vmem>>, vector<64x32xf32>
    tpu.vector_store %arg10[%c0_24, %c0_25], %49 {strides = array<i32>} : memref<64x32xf32, #tpu.memory_space<vmem>>, vector<64x32xf32>,
    %c0_26 = arith.constant 0 : index
    %c0_27 = arith.constant 0 : index
    %51 = vector.load %arg2[%c0_26, %c0_27] : memref<8x128xf32, #tpu.memory_space<vmem>>, vector<8x128xf32>
    %c0_28 = arith.constant 0 : index
    %c0_29 = arith.constant 0 : index
    %52 = vector.load %arg3[%c0_28, %c0_29] : memref<1x128xf32, #tpu.memory_space<vmem>>, vector<1x128xf32>
    %53 = vector.broadcast %52 : vector<1x128xf32> to vector<8x128xf32>
    %54 = arith.mulf %51, %53 : vector<8x128xf32>
    %c0_30 = arith.constant 0 : index
    %c0_31 = arith.constant 0 : index
    %55 = vector.load %arg11[%c0_30, %c0_31] : memref<8x128xf32, #tpu.memory_space<vmem>>, vector<8x128xf32>
    tpu.vector_store %arg11[%c0_30, %c0_31], %54 {strides = array<i32>} : memref<8x128xf32, #tpu.memory_space<vmem>>, vector<8x128xf32>,
    return
  }
  func.func @transform_0(%arg0: i32) -> (i32, i32) {
    %c0_i32 = arith.constant 0 : i32
    %c0_i32_0 = arith.constant 0 : i32
    return %arg0, %c0_i32 : i32, i32
  }
  func.func @transform_1(%arg0: i32) -> (i32, i32) {
    %c0_i32 = arith.constant 0 : i32
    %c0_i32_0 = arith.constant 0 : i32
    return %arg0, %c0_i32 : i32, i32
  }
  func.func @transform_2(%arg0: i32) -> (i32, i32) {
    %c0_i32 = arith.constant 0 : i32
    %c0_i32_0 = arith.constant 0 : i32
    %c0_i32_1 = arith.constant 0 : i32
    return %c0_i32, %c0_i32_0 : i32, i32
  }
  func.func @transform_3(%arg0: i32) -> (i32, i32) {
    %c0_i32 = arith.constant 0 : i32
    %c0_i32_0 = arith.constant 0 : i32
    %c0_i32_1 = arith.constant 0 : i32
    return %c0_i32, %c0_i32_0 : i32, i32
  }
  func.func @transform_4(%arg0: i32) -> (i32, i32) {
    %c0_i32 = arith.constant 0 : i32
    %c0_i32_0 = arith.constant 0 : i32
    %c0_i32_1 = arith.constant 0 : i32
    return %c0_i32, %c0_i32_0 : i32, i32
  }
  func.func @transform_5(%arg0: i32) -> (i32, i32) {
    %c0_i32 = arith.constant 0 : i32
    %c0_i32_0 = arith.constant 0 : i32
    %c0_i32_1 = arith.constant 0 : i32
    return %c0_i32, %c0_i32_0 : i32, i32
  }
  func.func @transform_6(%arg0: i32) -> (i32, i32) {
    %c0_i32 = arith.constant 0 : i32
    %c0_i32_0 = arith.constant 0 : i32
    %c0_i32_1 = arith.constant 0 : i32
    return %c0_i32, %c0_i32_0 : i32, i32
  }
  func.func @transform_7(%arg0: i32) -> (i32, i32) {
    %c0_i32 = arith.constant 0 : i32
    %c0_i32_0 = arith.constant 0 : i32
    %c0_i32_1 = arith.constant 0 : i32
    return %c0_i32, %c0_i32_0 : i32, i32
  }
  func.func @transform_8(%arg0: i32) -> (i32, i32) {
    %c0_i32 = arith.constant 0 : i32
    %c0_i32_0 = arith.constant 0 : i32
    %c0_i32_1 = arith.constant 0 : i32
    return %c0_i32, %c0_i32_0 : i32, i32
  }
  func.func @transform_9(%arg0: i32) -> (i32, i32) {
    %c0_i32 = arith.constant 0 : i32
    %c0_i32_0 = arith.constant 0 : i32
    return %arg0, %c0_i32 : i32, i32
  }
  func.func @transform_10(%arg0: i32) -> (i32, i32) {
    %c0_i32 = arith.constant 0 : i32
    %c0_i32_0 = arith.constant 0 : i32
    return %arg0, %c0_i32 : i32, i32
  }
}

</mosaic_0001>

<llo_original>
// kernel: tpu_custom_call.1
$region0: #{tpu_custom_call.1}
  #allocation0 [shape = 'u32[]', space=smem, size = 0x4, offset = 0x4, fixed_abs, tag = 'smem constant byte address 0x4 - core index']
  #allocation1 [shape = 'u32[144,128]{1,0:T(1,128)}', space=vmem, size = 0x12000, scoped, tag = 'internal scratch']
  %s0 = inlined_call_operand.vmem [shape: f32[64,32], index: 0, kind: input, shape index: {}]
  %s1 = inlined_call_operand.vmem [shape: f32[8,128], index: 1, kind: input, shape index: {}]
  %s2 = inlined_call_operand.vmem [shape: f32[1,128], index: 2, kind: input, shape index: {}]
  %s3 = inlined_call_operand.vmem [shape: bf16[32,64], index: 3, kind: input, shape index: {}]
  %s4 = inlined_call_operand.vmem [shape: f32[1,64], index: 4, kind: input, shape index: {}]
  %s5 = inlined_call_operand.vmem [shape: bf16[32,32], index: 5, kind: input, shape index: {}]
  %s6 = inlined_call_operand.vmem [shape: f32[1,32], index: 6, kind: input, shape index: {}]
  %s7 = inlined_call_operand.vmem [shape: bf16[32,32], index: 7, kind: input, shape index: {}]
  %s8 = inlined_call_operand.vmem [shape: f32[1,32], index: 8, kind: input, shape index: {}]
  %s9 = inlined_call_operand.vmem [shape: f32[64,32], index: 9, kind: output, shape index: {0}]
  %s10 = inlined_call_operand.hbm [shape: f32[8,128], index: 10, kind: output, shape index: {1}]
  %11 = xla_tuple %s9, %s10
  %s12 = sld [smem:[#allocation0]]
  $region54: #{tpu_custom_call.1} parent=0
    _
  %s14 = ssub.s32 1, %s12
  %s15 = scalar_select 0, %s14, %s12
  $region1: #{tpu_custom_call.1} parent=0
    #allocation2 [shape = 'u8[4096]{0}', space=vmem, size = 0x1000, scoped, tag = 'output window, operand 1, single buffered']
    #allocation3 [shape = 's32[1]{0}', space=sflag, size = 0x4, scoped, tag = 'scoped memory for tpu_custom_call.1']
    %16 = vsyncpa [#allocation3], 0
    // Predicated region
    $region2: #{tpu_custom_call.1} parent=1 // pred_check
      _
    $region3: #{tpu_custom_call.1} parent=1 // pred_check_branch
      %18 = sbr.rel (0) target = $region5
    $region4: #{tpu_custom_call.1} parent=1 // pred_region
      _
    $region5: #{tpu_custom_call.1} parent=1 // pred_fallthru
      _
    // Predicated region
    $region6: #{tpu_custom_call.1} parent=1 // pred_check
      _
    $region7: #{tpu_custom_call.1} parent=1 // pred_check_branch
      %20 = sbr.rel (0) target = $region9
    $region8: #{tpu_custom_call.1} parent=1 // pred_region
      _
    $region9: #{tpu_custom_call.1} parent=1 // pred_fallthru
      _
    // Predicated region
    $region10: #{tpu_custom_call.1} parent=1 // pred_check
      _
    $region11: #{tpu_custom_call.1} parent=1 // pred_check_branch
      %22 = sbr.rel (0) target = $region13
    $region12: #{tpu_custom_call.1} parent=1 // pred_region
      _
    $region13: #{tpu_custom_call.1} parent=1 // pred_fallthru
      _
    // Predicated region
    $region14: #{tpu_custom_call.1} parent=1 // pred_check
      _
    $region15: #{tpu_custom_call.1} parent=1 // pred_check_branch
      %24 = sbr.rel (0) target = $region17
    $region16: #{tpu_custom_call.1} parent=1 // pred_region
      _
    $region17: #{tpu_custom_call.1} parent=1 // pred_fallthru
      _
    // Predicated region
    $region18: #{tpu_custom_call.1} parent=1 // pred_check
      _
    $region19: #{tpu_custom_call.1} parent=1 // pred_check_branch
      %26 = sbr.rel (0) target = $region21
    $region20: #{tpu_custom_call.1} parent=1 // pred_region
      _
    $region21: #{tpu_custom_call.1} parent=1 // pred_fallthru
      _
    // Predicated region
    $region22: #{tpu_custom_call.1} parent=1 // pred_check
      _
    $region23: #{tpu_custom_call.1} parent=1 // pred_check_branch
      %28 = sbr.rel (0) target = $region25
    $region24: #{tpu_custom_call.1} parent=1 // pred_region
      _
    $region25: #{tpu_custom_call.1} parent=1 // pred_fallthru
      _
    // Predicated region
    $region26: #{tpu_custom_call.1} parent=1 // pred_check
      _
    $region27: #{tpu_custom_call.1} parent=1 // pred_check_branch
      %30 = sbr.rel (0) target = $region29
    $region28: #{tpu_custom_call.1} parent=1 // pred_region
      _
    $region29: #{tpu_custom_call.1} parent=1 // pred_fallthru
      _
    // Predicated region
    $region30: #{tpu_custom_call.1} parent=1 // pred_check
      _
    $region31: #{tpu_custom_call.1} parent=1 // pred_check_branch
      %32 = sbr.rel (0) target = $region33
    $region32: #{tpu_custom_call.1} parent=1 // pred_region
      _
    $region33: #{tpu_custom_call.1} parent=1 // pred_fallthru
      _
    // Predicated region
    $region34: #{tpu_custom_call.1} parent=1 // pred_check
      _
    $region35: #{tpu_custom_call.1} parent=1 // pred_check_branch
      %34 = sbr.rel (0) target = $region37
    $region36: #{tpu_custom_call.1} parent=1 // pred_region
      _
    $region37: #{tpu_custom_call.1} parent=1 // pred_fallthru
      _
    %v36 = vld [vmem:[%s0] sm:$0xff]
    %v37 = vld [vmem:[%s0 + $0x8] sm:$0xff]
    %v38 = vld [vmem:[%s0 + $0x10] sm:$0xff]
    %v39 = vld [vmem:[%s0 + $0x18] sm:$0xff]
    %v40 = vld [vmem:[%s0 + $0x20] sm:$0xff]
    %v41 = vld [vmem:[%s0 + $0x28] sm:$0xff]
    %v42 = vld [vmem:[%s0 + $0x30] sm:$0xff]
    %v43 = vld [vmem:[%s0 + $0x38] sm:$0xff]
    %v44 = vmul.f32 %v36, %v36
    %v45 = vmul.f32 %v37, %v37
    %v46 = vmul.f32 %v38, %v38
    %v47 = vmul.f32 %v39, %v39
    %v48 = vmul.f32 %v40, %v40
    %v49 = vmul.f32 %v41, %v41
    %v50 = vmul.f32 %v42, %v42
    %v51 = vmul.f32 %v43, %v43
    %vm52 = vcmask 261120
    %v53 = vsel %vm52, %v44, 0.0
    %54 = vadd.xlane.f32.xlu0 %v53
    %v55 = vpop.xlane.xlu0 %54
    %v56 = vsel %vm52, %v45, 0.0
    %57 = vadd.xlane.f32.xlu0 %v56
    %v58 = vpop.xlane.xlu0 %57
    %v59 = vsel %vm52, %v46, 0.0
    %60 = vadd.xlane.f32.xlu0 %v59
    %v61 = vpop.xlane.xlu0 %60
    %v62 = vsel %vm52, %v47, 0.0
    %63 = vadd.xlane.f32.xlu0 %v62
    %v64 = vpop.xlane.xlu0 %63
    %v65 = vsel %vm52, %v48, 0.0
    %66 = vadd.xlane.f32.xlu0 %v65
    %v67 = vpop.xlane.xlu0 %66
    %v68 = vsel %vm52, %v49, 0.0
    %69 = vadd.xlane.f32.xlu0 %v68
    %v70 = vpop.xlane.xlu0 %69
    %v71 = vsel %vm52, %v50, 0.0
    %72 = vadd.xlane.f32.xlu0 %v71
    %v73 = vpop.xlane.xlu0 %72
    %v74 = vsel %vm52, %v51, 0.0
    %75 = vadd.xlane.f32.xlu0 %v74
    %v76 = vpop.xlane.xlu0 %75
    %v77 = vrsqrt.pop %v55
    %v78 = vmul.f32 %v55, %v77
    %vm79 = vcmp.eq.f32.partialorder %v55, inf
    %v80 = vsel %vm79, %v55, %v78
    %vm81 = vcmp.eq.f32.partialorder %v55, 0.0
    %v82 = vand.u32 %v55, 2147483648
    %v83 = vsel %vm81, %v82, %v80
    %v84 = vrsqrt.pop %v58
    %v85 = vmul.f32 %v58, %v84
    %vm86 = vcmp.eq.f32.partialorder %v58, inf
    %v87 = vsel %vm86, %v58, %v85
    %vm88 = vcmp.eq.f32.partialorder %v58, 0.0
    %v89 = vand.u32 %v58, 2147483648
    %v90 = vsel %vm88, %v89, %v87
    %v91 = vrsqrt.pop %v61
    %v92 = vmul.f32 %v61, %v91
    %vm93 = vcmp.eq.f32.partialorder %v61, inf
    %v94 = vsel %vm93, %v61, %v92
    %vm95 = vcmp.eq.f32.partialorder %v61, 0.0
    %v96 = vand.u32 %v61, 2147483648
    %v97 = vsel %vm95, %v96, %v94
    %v98 = vrsqrt.pop %v64
    %v99 = vmul.f32 %v64, %v98
    %vm100 = vcmp.eq.f32.partialorder %v64, inf
    %v101 = vsel %vm100, %v64, %v99
    %vm102 = vcmp.eq.f32.partialorder %v64, 0.0
    %v103 = vand.u32 %v64, 2147483648
    %v104 = vsel %vm102, %v103, %v101
    %v105 = vrsqrt.pop %v67
    %v106 = vmul.f32 %v67, %v105
    %vm107 = vcmp.eq.f32.partialorder %v67, inf
    %v108 = vsel %vm107, %v67, %v106
    %vm109 = vcmp.eq.f32.partialorder %v67, 0.0
    %v110 = vand.u32 %v67, 2147483648
    %v111 = vsel %vm109, %v110, %v108
    %v112 = vrsqrt.pop %v70
    %v113 = vmul.f32 %v70, %v112
    %vm114 = vcmp.eq.f32.partialorder %v70, inf
    %v115 = vsel %vm114, %v70, %v113
    %vm116 = vcmp.eq.f32.partialorder %v70, 0.0
    %v117 = vand.u32 %v70, 2147483648
    %v118 = vsel %vm116, %v117, %v115
    %v119 = vrsqrt.pop %v73
    %v120 = vmul.f32 %v73, %v119
    %vm121 = vcmp.eq.f32.partialorder %v73, inf
    %v122 = vsel %vm121, %v73, %v120
    %vm123 = vcmp.eq.f32.partialorder %v73, 0.0
    %v124 = vand.u32 %v73, 2147483648
    %v125 = vsel %vm123, %v124, %v122
    %v126 = vrsqrt.pop %v76
    %v127 = vmul.f32 %v76, %v126
    %vm128 = vcmp.eq.f32.partialorder %v76, inf
    %v129 = vsel %vm128, %v76, %v127
    %vm130 = vcmp.eq.f32.partialorder %v76, 0.0
    %v131 = vand.u32 %v76, 2147483648
    %v132 = vsel %vm130, %v131, %v129
    %v133 = vpack.c.bf16 %v37, %v36
    %v134 = vpack.c.bf16 %v39, %v38
    %v135 = vpack.c.bf16 %v41, %v40
    %v136 = vpack.c.bf16 %v43, %v42
    %v137 = vld [vmem:[%s3] sm:$0xf]
    %v138 = vld [vmem:[%s3 + $0x4] sm:$0xf]
    %v139 = vld [vmem:[%s3 + $0x8] sm:$0xf]
    %v140 = vld [vmem:[%s3 + $0xc] sm:$0xf]
    %v141 = vld [vmem:[%s4] sm:$0x1]
    %v143 = vlaneseq
    %v144 = vshrl.u32 %v143, 7
    %v145 = vsub.s32 0, %v144
    %v146 = vrot.slane %v141, %v145
    %v152 = vunpack.c.l.b16 %v137
    %v153 = vunpack.c.l.b16 %v138
    %v154 = vunpack.c.l.b16 %v139
    %v155 = vunpack.c.l.b16 %v140
    %v156 = vpack.c.b16 %v153, %v152
    %v157 = vpack.c.b16 %v155, %v154
    %v161 = vsel %vm52, %v133, 0
    %v164 = vsel %vm52, %v134, 0
    %v167 = vsel %vm52, %v135, 0
    %v170 = vsel %vm52, %v136, 0
    %172 = vmatprep.subr.bf16.mxu0 0
    %173 = vmatpush1.bf16.msra.mxu0 0
    %174 = vmatprep.subr.bf16.mxu0 0
    %175 = vmatpush1.bf16.msra.mxu0 0
    %176 = vmatprep.subr.bf16.mxu0 0
    %177 = vmatpush1.bf16.msra.mxu0 0
    %178 = vmatprep.subr.bf16.mxu0 0
    %179 = vmatpush1.bf16.msra.mxu0 0
    %180 = vmatprep.subr.bf16.mxu0 0
    %181 = vmatpush1.bf16.msra.mxu0 0
    %182 = vmatprep.subr.bf16.mxu0 0
    %183 = vmatpush1.bf16.msra.mxu0 0
    %184 = vmatprep.subr.bf16.mxu0 0
    %185 = vmatpush1.bf16.msra.mxu0 %v157
    %186 = vmatprep.subr.bf16.mxu0 0
    %187 = vmatpush1.bf16.msra.mxu0 %v156
    %188 = vmatprep.subr.bf16.mxu0 0
    %189 = vmatpush2.bf16.msra.mxu0 0
    %190 = vmatprep.subr.bf16.mxu0 0
    %191 = vmatpush2.bf16.msra.mxu0 0
    %192 = vmatprep.subr.bf16.mxu0 0
    %193 = vmatpush2.bf16.msra.mxu0 0
    %194 = vmatprep.subr.bf16.mxu0 0
    %195 = vmatpush2.bf16.msra.mxu0 0
    %196 = vmatprep.subr.bf16.mxu0 0
    %197 = vmatpush2.bf16.msra.mxu0 0
    %198 = vmatprep.subr.bf16.mxu0 0
    %199 = vmatpush2.bf16.msra.mxu0 0
    %200 = vmatprep.subr.bf16.mxu0 0
    %201 = vmatpush2.bf16.msra.mxu0 0
    %202 = vmatprep.subr.bf16.mxu0 0
    %203 = vmatpush2.bf16.msra.mxu0 0
    %204 = vmatprep.mubr.bf16.mxu0 0
    %205 = vmatmul.mubr.bf16.gmra.mxu0 %v161
    %v206 = vpop.f32.mrf.mxu0
    %v207 = vadd.f32 %v146, %v206
    %v208 = vpop.f32.mrf.mxu0
    %v209 = vpop.f32.mrf.mxu0
    %v210 = vadd.f32 %v146, %v209
    %v211 = vpop.f32.mrf.mxu0
    %212 = vmatprep.mubr.bf16.mxu0 0
    %213 = vmatmul.mubr.bf16.gmra.mxu0 %v164
    %v214 = vpop.f32.mrf.mxu0
    %v215 = vadd.f32 %v146, %v214
    %v216 = vpop.f32.mrf.mxu0
    %v217 = vpop.f32.mrf.mxu0
    %v218 = vadd.f32 %v146, %v217
    %v219 = vpop.f32.mrf.mxu0
    %220 = vmatprep.mubr.bf16.mxu0 0
    %221 = vmatmul.mubr.bf16.gmra.mxu0 %v167
    %v222 = vpop.f32.mrf.mxu0
    %v223 = vadd.f32 %v146, %v222
    %v224 = vpop.f32.mrf.mxu0
    %v225 = vpop.f32.mrf.mxu0
    %v226 = vadd.f32 %v146, %v225
    %v227 = vpop.f32.mrf.mxu0
    %228 = vmatprep.mubr.bf16.mxu0 0
    %229 = vmatmul.mubr.bf16.gmra.mxu0 %v170
    %v230 = vpop.f32.mrf.mxu0
    %v231 = vadd.f32 %v146, %v230
    %v232 = vpop.f32.mrf.mxu0
    %v233 = vpop.f32.mrf.mxu0
    %v234 = vadd.f32 %v146, %v233
    %v235 = vpop.f32.mrf.mxu0
    %236 = vdwg.mxu0
    %v237 = vmax.f32 %v207, 0.0
    %v238 = vmax.f32 %v210, 0.0
    %v239 = vmax.f32 %v215, 0.0
    %v240 = vmax.f32 %v218, 0.0
    %v241 = vmax.f32 %v223, 0.0
    %v242 = vmax.f32 %v226, 0.0
    %v243 = vmax.f32 %v231, 0.0
    %v244 = vmax.f32 %v234, 0.0
    %v245 = vpack.c.bf16 %v238, %v237
    %v246 = vpack.c.bf16 %v240, %v239
    %v247 = vpack.c.bf16 %v242, %v241
    %v248 = vpack.c.bf16 %v244, %v243
    %v249 = vld [vmem:[%s5] sm:$0xf]
    %v250 = vld [vmem:[%s5 + $0x4] sm:$0xf]
    %v251 = vld [vmem:[%s5 + $0x8] sm:$0xf]
    %v252 = vld [vmem:[%s5 + $0xc] sm:$0xf]
    %v253 = vld [vmem:[%s6] sm:$0x1]
    %v255 = vlaneseq
    %v256 = vshrl.u32 %v255, 7
    %v257 = vsub.s32 0, %v256
    %v258 = vrot.slane %v253, %v257
    %264 = vrot.lane.b32.xlu0 %v245, 96
    %v265 = vpop.permute.xlu0 %264
    %266 = vrot.lane.b32.xlu0 %v246, 96
    %v267 = vpop.permute.xlu0 %266
    %268 = vrot.lane.b32.xlu0 %v247, 96
    %v269 = vpop.permute.xlu0 %268
    %270 = vrot.lane.b32.xlu0 %v248, 96
    %v271 = vpop.permute.xlu0 %270
    %v276 = vunpack.c.l.b16 %v249
    %v277 = vunpack.c.l.b16 %v250
    %v278 = vunpack.c.l.b16 %v251
    %v279 = vunpack.c.l.b16 %v252
    %v280 = vpack.c.b16 %v277, %v276
    %v281 = vpack.c.b16 %v279, %v278
    %v285 = vsel %vm52, %v265, 0
    %v288 = vsel %vm52, %v267, 0
    %v291 = vsel %vm52, %v269, 0
    %v294 = vsel %vm52, %v271, 0
    %296 = vmatprep.subr.bf16.mxu0 0
    %297 = vmatpush1.bf16.msra.mxu0 0
    %298 = vmatprep.subr.bf16.mxu0 0
    %299 = vmatpush1.bf16.msra.mxu0 0
    %300 = vmatprep.subr.bf16.mxu0 0
    %301 = vmatpush1.bf16.msra.mxu0 0
    %302 = vmatprep.subr.bf16.mxu0 0
    %303 = vmatpush1.bf16.msra.mxu0 0
    %304 = vmatprep.subr.bf16.mxu0 0
    %305 = vmatpush1.bf16.msra.mxu0 0
    %306 = vmatprep.subr.bf16.mxu0 0
    %307 = vmatpush1.bf16.msra.mxu0 0
    %308 = vmatprep.subr.bf16.mxu0 0
    %309 = vmatpush1.bf16.msra.mxu0 %v281
    %310 = vmatprep.subr.bf16.mxu0 0
    %311 = vmatpush1.bf16.msra.mxu0 %v280
    %312 = vmatprep.subr.bf16.mxu0 0
    %313 = vmatpush2.bf16.msra.mxu0 0
    %314 = vmatprep.subr.bf16.mxu0 0
    %315 = vmatpush2.bf16.msra.mxu0 0
    %316 = vmatprep.subr.bf16.mxu0 0
    %317 = vmatpush2.bf16.msra.mxu0 0
    %318 = vmatprep.subr.bf16.mxu0 0
    %319 = vmatpush2.bf16.msra.mxu0 0
    %320 = vmatprep.subr.bf16.mxu0 0
    %321 = vmatpush2.bf16.msra.mxu0 0
    %322 = vmatprep.subr.bf16.mxu0 0
    %323 = vmatpush2.bf16.msra.mxu0 0
    %324 = vmatprep.subr.bf16.mxu0 0
    %325 = vmatpush2.bf16.msra.mxu0 0
    %326 = vmatprep.subr.bf16.mxu0 0
    %327 = vmatpush2.bf16.msra.mxu0 0
    %328 = vmatprep.mubr.bf16.mxu0 0
    %329 = vmatmul.mubr.bf16.gmra.mxu0 %v285
    %v330 = vpop.f32.mrf.mxu0
    %v331 = vadd.f32 %v258, %v330
    %v332 = vpop.f32.mrf.mxu0
    %v333 = vpop.f32.mrf.mxu0
    %v334 = vadd.f32 %v258, %v333
    %v335 = vpop.f32.mrf.mxu0
    %336 = vmatprep.mubr.bf16.mxu0 0
    %337 = vmatmul.mubr.bf16.gmra.mxu0 %v288
    %v338 = vpop.f32.mrf.mxu0
    %v339 = vadd.f32 %v258, %v338
    %v340 = vpop.f32.mrf.mxu0
    %v341 = vpop.f32.mrf.mxu0
    %v342 = vadd.f32 %v258, %v341
    %v343 = vpop.f32.mrf.mxu0
    %344 = vmatprep.mubr.bf16.mxu0 0
    %345 = vmatmul.mubr.bf16.gmra.mxu0 %v291
    %v346 = vpop.f32.mrf.mxu0
    %v347 = vadd.f32 %v258, %v346
    %v348 = vpop.f32.mrf.mxu0
    %v349 = vpop.f32.mrf.mxu0
    %v350 = vadd.f32 %v258, %v349
    %v351 = vpop.f32.mrf.mxu0
    %352 = vmatprep.mubr.bf16.mxu0 0
    %353 = vmatmul.mubr.bf16.gmra.mxu0 %v294
    %v354 = vpop.f32.mrf.mxu0
    %v355 = vadd.f32 %v258, %v354
    %v356 = vpop.f32.mrf.mxu0
    %v357 = vpop.f32.mrf.mxu0
    %v358 = vadd.f32 %v258, %v357
    %v359 = vpop.f32.mrf.mxu0
    %360 = vdwg.mxu0
    %v361 = vadd.f32 %v207, %v331
    %v362 = vadd.f32 %v210, %v334
    %v363 = vadd.f32 %v215, %v339
    %v364 = vadd.f32 %v218, %v342
    %v365 = vadd.f32 %v223, %v347
    %v366 = vadd.f32 %v226, %v350
    %v367 = vadd.f32 %v231, %v355
    %v368 = vadd.f32 %v234, %v358
    %v369 = vsel %vm52, %v361, 0.0
    %370 = vadd.xlane.f32.xlu0 %v369
    %v371 = vpop.xlane.xlu0 %370
    %v372 = vsel %vm52, %v362, 0.0
    %373 = vadd.xlane.f32.xlu0 %v372
    %v374 = vpop.xlane.xlu0 %373
    %v375 = vsel %vm52, %v363, 0.0
    %376 = vadd.xlane.f32.xlu0 %v375
    %v377 = vpop.xlane.xlu0 %376
    %v378 = vsel %vm52, %v364, 0.0
    %379 = vadd.xlane.f32.xlu0 %v378
    %v380 = vpop.xlane.xlu0 %379
    %v381 = vsel %vm52, %v365, 0.0
    %382 = vadd.xlane.f32.xlu0 %v381
    %v383 = vpop.xlane.xlu0 %382
    %v384 = vsel %vm52, %v366, 0.0
    %385 = vadd.xlane.f32.xlu0 %v384
    %v386 = vpop.xlane.xlu0 %385
    %v387 = vsel %vm52, %v367, 0.0
    %388 = vadd.xlane.f32.xlu0 %v387
    %v389 = vpop.xlane.xlu0 %388
    %v390 = vsel %vm52, %v368, 0.0
    %391 = vadd.xlane.f32.xlu0 %v390
    %v392 = vpop.xlane.xlu0 %391
    %v393 = vrcp.pop 32.0
    %v394 = vmul.f32 %v371, %v393
    %v395 = vmul.f32 %v374, %v393
    %v396 = vmul.f32 %v377, %v393
    %v397 = vmul.f32 %v380, %v393
    %v398 = vmul.f32 %v383, %v393
    %v399 = vmul.f32 %v386, %v393
    %v400 = vmul.f32 %v389, %v393
    %v401 = vmul.f32 %v392, %v393
    %v402 = vsub.f32 %v361, %v394
    %v403 = vsub.f32 %v362, %v395
    %v404 = vsub.f32 %v363, %v396
    %v405 = vsub.f32 %v364, %v397
    %v406 = vsub.f32 %v365, %v398
    %v407 = vsub.f32 %v366, %v399
    %v408 = vsub.f32 %v367, %v400
    %v409 = vsub.f32 %v368, %v401
    %v410 = vmul.f32 %v402, %v402
    %v411 = vmul.f32 %v403, %v403
    %v412 = vmul.f32 %v404, %v404
    %v413 = vmul.f32 %v405, %v405
    %v414 = vmul.f32 %v406, %v406
    %v415 = vmul.f32 %v407, %v407
    %v416 = vmul.f32 %v408, %v408
    %v417 = vmul.f32 %v409, %v409
    %v418 = vsel %vm52, %v410, 0.0
    %419 = vadd.xlane.f32.xlu0 %v418
    %v420 = vpop.xlane.xlu0 %419
    %v421 = vsel %vm52, %v411, 0.0
    %422 = vadd.xlane.f32.xlu0 %v421
    %v423 = vpop.xlane.xlu0 %422
    %v424 = vsel %vm52, %v412, 0.0
    %425 = vadd.xlane.f32.xlu0 %v424
    %v426 = vpop.xlane.xlu0 %425
    %v427 = vsel %vm52, %v413, 0.0
    %428 = vadd.xlane.f32.xlu0 %v427
    %v429 = vpop.xlane.xlu0 %428
    %v430 = vsel %vm52, %v414, 0.0
    %431 = vadd.xlane.f32.xlu0 %v430
    %v432 = vpop.xlane.xlu0 %431
    %v433 = vsel %vm52, %v415, 0.0
    %434 = vadd.xlane.f32.xlu0 %v433
    %v435 = vpop.xlane.xlu0 %434
    %v436 = vsel %vm52, %v416, 0.0
    %437 = vadd.xlane.f32.xlu0 %v436
    %v438 = vpop.xlane.xlu0 %437
    %v439 = vsel %vm52, %v417, 0.0
    %440 = vadd.xlane.f32.xlu0 %v439
    %v441 = vpop.xlane.xlu0 %440
    %v442 = vmul.f32 %v420, %v393
    %v443 = vmul.f32 %v423, %v393
    %v444 = vmul.f32 %v426, %v393
    %v445 = vmul.f32 %v429, %v393
    %v446 = vmul.f32 %v432, %v393
    %v447 = vmul.f32 %v435, %v393
    %v448 = vmul.f32 %v438, %v393
    %v449 = vmul.f32 %v441, %v393
    %v450 = vadd.f32 %v442, 1e-05
    %v451 = vadd.f32 %v443, 1e-05
    %v452 = vadd.f32 %v444, 1e-05
    %v453 = vadd.f32 %v445, 1e-05
    %v454 = vadd.f32 %v446, 1e-05
    %v455 = vadd.f32 %v447, 1e-05
    %v456 = vadd.f32 %v448, 1e-05
    %v457 = vadd.f32 %v449, 1e-05
    %v458 = vrsqrt.pop %v450
    %v459 = vrsqrt.pop %v451
    %v460 = vrsqrt.pop %v452
    %v461 = vrsqrt.pop %v453
    %v462 = vrsqrt.pop %v454
    %v463 = vrsqrt.pop %v455
    %v464 = vrsqrt.pop %v456
    %v465 = vrsqrt.pop %v457
    %v466 = vmul.f32 %v402, %v458
    %v467 = vmul.f32 %v403, %v459
    %v468 = vmul.f32 %v404, %v460
    %v469 = vmul.f32 %v405, %v461
    %v470 = vmul.f32 %v406, %v462
    %v471 = vmul.f32 %v407, %v463
    %v472 = vmul.f32 %v408, %v464
    %v473 = vmul.f32 %v409, %v465
    %v474 = vpack.c.bf16 %v467, %v466
    %v475 = vpack.c.bf16 %v469, %v468
    %v476 = vpack.c.bf16 %v471, %v470
    %v477 = vpack.c.bf16 %v473, %v472
    %v478 = vld [vmem:[%s7] sm:$0xf]
    %v479 = vld [vmem:[%s7 + $0x4] sm:$0xf]
    %v480 = vld [vmem:[%s7 + $0x8] sm:$0xf]
    %v481 = vld [vmem:[%s7 + $0xc] sm:$0xf]
    %v482 = vld [vmem:[%s8] sm:$0x1]
    %v484 = vlaneseq
    %v485 = vshrl.u32 %v484, 7
    %v486 = vsub.s32 0, %v485
    %v487 = vrot.slane %v482, %v486
    %v493 = vunpack.c.l.b16 %v478
    %v494 = vunpack.c.l.b16 %v479
    %v495 = vunpack.c.l.b16 %v480
    %v496 = vunpack.c.l.b16 %v481
    %v497 = vpack.c.b16 %v494, %v493
    %v498 = vpack.c.b16 %v496, %v495
    %v502 = vsel %vm52, %v474, 0
    %v505 = vsel %vm52, %v475, 0
    %v508 = vsel %vm52, %v476, 0
    %v511 = vsel %vm52, %v477, 0
    %513 = vmatprep.subr.bf16.mxu0 0
    %514 = vmatpush1.bf16.msra.mxu0 0
    %515 = vmatprep.subr.bf16.mxu0 0
    %516 = vmatpush1.bf16.msra.mxu0 0
    %517 = vmatprep.subr.bf16.mxu0 0
    %518 = vmatpush1.bf16.msra.mxu0 0
    %519 = vmatprep.subr.bf16.mxu0 0
    %520 = vmatpush1.bf16.msra.mxu0 0
    %521 = vmatprep.subr.bf16.mxu0 0
    %522 = vmatpush1.bf16.msra.mxu0 0
    %523 = vmatprep.subr.bf16.mxu0 0
    %524 = vmatpush1.bf16.msra.mxu0 0
    %525 = vmatprep.subr.bf16.mxu0 0
    %526 = vmatpush1.bf16.msra.mxu0 %v498
    %527 = vmatprep.subr.bf16.mxu0 0
    %528 = vmatpush1.bf16.msra.mxu0 %v497
    %529 = vmatprep.subr.bf16.mxu0 0
    %530 = vmatpush2.bf16.msra.mxu0 0
    %531 = vmatprep.subr.bf16.mxu0 0
    %532 = vmatpush2.bf16.msra.mxu0 0
    %533 = vmatprep.subr.bf16.mxu0 0
    %534 = vmatpush2.bf16.msra.mxu0 0
    %535 = vmatprep.subr.bf16.mxu0 0
    %536 = vmatpush2.bf16.msra.mxu0 0
    %537 = vmatprep.subr.bf16.mxu0 0
    %538 = vmatpush2.bf16.msra.mxu0 0
    %539 = vmatprep.subr.bf16.mxu0 0
    %540 = vmatpush2.bf16.msra.mxu0 0
    %541 = vmatprep.subr.bf16.mxu0 0
    %542 = vmatpush2.bf16.msra.mxu0 0
    %543 = vmatprep.subr.bf16.mxu0 0
    %544 = vmatpush2.bf16.msra.mxu0 0
    %545 = vmatprep.mubr.bf16.mxu0 0
    %546 = vmatmul.mubr.bf16.gmra.mxu0 %v502
    %v547 = vpop.f32.mrf.mxu0
    %v548 = vadd.f32 %v487, %v547
    %v549 = vpop.f32.mrf.mxu0
    %v550 = vpop.f32.mrf.mxu0
    %v551 = vadd.f32 %v487, %v550
    %v552 = vpop.f32.mrf.mxu0
    %553 = vmatprep.mubr.bf16.mxu0 0
    %554 = vmatmul.mubr.bf16.gmra.mxu0 %v505
    %v555 = vpop.f32.mrf.mxu0
    %v556 = vadd.f32 %v487, %v555
    %v557 = vpop.f32.mrf.mxu0
    %v558 = vpop.f32.mrf.mxu0
    %v559 = vadd.f32 %v487, %v558
    %v560 = vpop.f32.mrf.mxu0
    %561 = vmatprep.mubr.bf16.mxu0 0
    %562 = vmatmul.mubr.bf16.gmra.mxu0 %v508
    %v563 = vpop.f32.mrf.mxu0
    %v564 = vadd.f32 %v487, %v563
    %v565 = vpop.f32.mrf.mxu0
    %v566 = vpop.f32.mrf.mxu0
    %v567 = vadd.f32 %v487, %v566
    %v568 = vpop.f32.mrf.mxu0
    %569 = vmatprep.mubr.bf16.mxu0 0
    %570 = vmatmul.mubr.bf16.gmra.mxu0 %v511
    %v571 = vpop.f32.mrf.mxu0
    %v572 = vadd.f32 %v487, %v571
    %v573 = vpop.f32.mrf.mxu0
    %v574 = vpop.f32.mrf.mxu0
    %v575 = vadd.f32 %v487, %v574
    %v576 = vpop.f32.mrf.mxu0
    %577 = vdwg.mxu0
    %vm578 = vcmp.lt.f32.partialorder %v83, 0.0001
    %vm579 = vcmp.lt.f32.partialorder %v90, 0.0001
    %vm580 = vcmp.lt.f32.partialorder %v97, 0.0001
    %vm581 = vcmp.lt.f32.partialorder %v104, 0.0001
    %vm582 = vcmp.lt.f32.partialorder %v111, 0.0001
    %vm583 = vcmp.lt.f32.partialorder %v118, 0.0001
    %vm584 = vcmp.lt.f32.partialorder %v125, 0.0001
    %vm585 = vcmp.lt.f32.partialorder %v132, 0.0001
    %v586 = vsel %vm578, 1, 0
    %v587 = vsel %vm579, 1, 0
    %v588 = vsel %vm580, 1, 0
    %v589 = vsel %vm581, 1, 0
    %v590 = vsel %vm582, 1, 0
    %v591 = vsel %vm583, 1, 0
    %v592 = vsel %vm584, 1, 0
    %v593 = vsel %vm585, 1, 0
    %vm594 = vcmp.eq.s32.totalorder %v586, 1
    %vm595 = vcmp.eq.s32.totalorder %v587, 1
    %vm596 = vcmp.eq.s32.totalorder %v588, 1
    %vm597 = vcmp.eq.s32.totalorder %v589, 1
    %vm598 = vcmp.eq.s32.totalorder %v590, 1
    %vm599 = vcmp.eq.s32.totalorder %v591, 1
    %vm600 = vcmp.eq.s32.totalorder %v592, 1
    %vm601 = vcmp.eq.s32.totalorder %v593, 1
    %v602 = vsel %vm594, 0.0, %v548
    %v603 = vsel %vm595, 0.0, %v551
    %v604 = vsel %vm596, 0.0, %v556
    %v605 = vsel %vm597, 0.0, %v559
    %v606 = vsel %vm598, 0.0, %v564
    %v607 = vsel %vm599, 0.0, %v567
    %v608 = vsel %vm600, 0.0, %v572
    %v609 = vsel %vm601, 0.0, %v575
    %610 = vst.msk [vmem:[%s9] sm:$0xff] %vm52, %v602
    %611 = vst.msk [vmem:[%s9 + $0x8] sm:$0xff] %vm52, %v603
    %612 = vst.msk [vmem:[%s9 + $0x10] sm:$0xff] %vm52, %v604
    %613 = vst.msk [vmem:[%s9 + $0x18] sm:$0xff] %vm52, %v605
    %614 = vst.msk [vmem:[%s9 + $0x20] sm:$0xff] %vm52, %v606
    %615 = vst.msk [vmem:[%s9 + $0x28] sm:$0xff] %vm52, %v607
    %616 = vst.msk [vmem:[%s9 + $0x30] sm:$0xff] %vm52, %v608
    %617 = vst.msk [vmem:[%s9 + $0x38] sm:$0xff] %vm52, %v609
    %v618 = vld [vmem:[%s1] sm:$0xff]
    %v619 = vld [vmem:[%s2] sm:$0x1]
    %v621 = vlaneseq
    %v622 = vshrl.u32 %v621, 7
    %v623 = vsub.s32 0, %v622
    %v624 = vrot.slane %v619, %v623
    %v626 = vmul.f32 %v618, %v624
    %627 = vst [vmem:[#allocation2] sm:$0xff] %v626
    // Predicated region
    $region38: #{tpu_custom_call.1} parent=1 // pred_check
      _
    $region39: #{tpu_custom_call.1} parent=1 // pred_check_branch
      %629 = sbr.rel (0) target = $region41
    $region40: #{tpu_custom_call.1} parent=1 // pred_region
      _
    $region41: #{tpu_custom_call.1} parent=1 // pred_fallthru
      _
    // Predicated region
    $region42: #{tpu_custom_call.1} parent=1 // pred_check
      _
    $region43: #{tpu_custom_call.1} parent=1 // pred_check_branch
      %631 = sbr.rel (0) target = $region45
    $region44: #{tpu_custom_call.1} parent=1 // pred_region
      %s633 = ssub.s32 128, 128
      %634 = vsyncadd [#allocation3], %s633
      %s636 = sshll.u32 [#allocation2], 4
      %s637 = int_to_ptr.vmem [resolvable:$true] %s636
      %639 = dma.vmem_to_hbm [thread:$0]  %s637, 128, %s10, [#allocation3]
    $region45: #{tpu_custom_call.1} parent=1 // pred_fallthru
      _
    // Predicated region
    $region46: #{tpu_custom_call.1} parent=1 // pred_check
      _
    $region47: #{tpu_custom_call.1} parent=1 // pred_check_branch
      %641 = sbr.rel (0) target = $region49
    $region48: #{tpu_custom_call.1} parent=1 // pred_region
      _
    $region49: #{tpu_custom_call.1} parent=1 // pred_fallthru
      _
    // Predicated region
    $region50: #{tpu_custom_call.1} parent=1 // pred_check
      _
    $region51: #{tpu_custom_call.1} parent=1 // pred_check_branch
      %643 = sbr.rel (0) target = $region53
    $region52: #{tpu_custom_call.1} parent=1 // pred_region
      %644 = dma.done [#allocation3], 128
    $region53: #{tpu_custom_call.1} parent=1 // pred_fallthru
      _
    %645 = vsyncpa [#allocation3], 1

</llo_original>
